<compile_context>
chip_gen: v7x
topology: tpu7x:2x2x1
jax: 0.10.0
libtpu: 0.0.40
codegen_flags: <defaults>
</compile_context>

<pallas_src>
import jax
import jax.numpy as jnp
from jax.experimental import pallas as pl
from jax.experimental.pallas import tpu as pltpu


def _cdiv(a, b):
    return -(-a // b)


def _round_up(x, m):
    return _cdiv(x, m) * m


def _tile_and_pad(dim, preferred, align):
    """Choose a tile size for `dim` and the zero-padded extent it divides."""
    if dim <= preferred:
        # Single block equal to the full dim — always a legal block shape.
        return dim, dim
    n_tiles = _cdiv(dim, preferred)
    tile = _round_up(_cdiv(dim, n_tiles), align)
    return tile, tile * n_tiles


def _vmem_capacity_bytes():
    """Best-effort query of per-core VMEM capacity (fallback: 128 MiB)."""
    try:
        info = pltpu.get_tpu_info()
        cap = int(getattr(info, "vmem_capacity_bytes", 0))
        if cap > 0:
            return cap
    except Exception:
        pass
    return 128 * 1024 * 1024


# ------------------------------- kernels ----------------------------------


def _conv1d_kernel_k1(x_ref, w_ref, b_ref, o_ref):
    # Fast path: the whole reduction dim fits one block — no scratch, single
    # lane-dense store per output tile.
    o_ref[...] = (jnp.dot(x_ref[...], w_ref[...],
                          preferred_element_type=jnp.float32)
                  + b_ref[...].astype(jnp.float32)).astype(o_ref.dtype)


def _conv1d_kernel_ktiled(x_ref, w_ref, b_ref, o_ref, acc_ref):
    # x_ref: (tm, tk), w_ref: (tk, tn), b_ref: (1, tn), o_ref: (tm, tn)
    # acc_ref: (tm, tn) f32 scratch, resident across the K (reduction) axis.
    k = pl.program_id(2)
    nk = pl.num_programs(2)

    partial = jnp.dot(x_ref[...], w_ref[...],
                      preferred_element_type=jnp.float32)

    @pl.when(k == 0)
    def _():
        acc_ref[...] = jnp.zeros_like(acc_ref)

    @pl.when(k < nk - 1)
    def _():
        acc_ref[...] += partial

    @pl.when(k == nk - 1)
    def _():
        # Fold the last partial product + bias into the store: saves one full
        # (tm, tn) f32 accumulator store + reload per output tile.
        o_ref[...] = (acc_ref[...] + partial
                      + b_ref[...].astype(jnp.float32)).astype(o_ref.dtype)


# ------------------------------- wrapper -----------------------------------


def conv1d(x, w, b, *, tm=None, tn=None, tk=None, cast_to_bf16=False):
    """y = x @ w + b over the last axis of x (GPT-2 Conv1D forward)."""
    *lead, nx = x.shape
    nx_w, nf = w.shape
    assert nx == nx_w, (nx, nx_w)

    out_dtype = x.dtype
    if cast_to_bf16:
        # Numerics-affecting: bf16 operands, f32 accumulate, original out dtype.
        x = x.astype(jnp.bfloat16)
        w = w.astype(jnp.bfloat16)

    x2 = x.reshape(-1, nx)
    M = x2.shape[0]

    x_isz = jnp.dtype(x2.dtype).itemsize
    w_isz = jnp.dtype(w.dtype).itemsize
    b_isz = jnp.dtype(b.dtype).itemsize
    o_isz = jnp.dtype(out_dtype).itemsize

    vmem_cap = _vmem_capacity_bytes()
    small_vmem = vmem_cap < 96 * 1024 * 1024  # v7x-class (64 MiB VMEM)

    # Generation / dtype-aware tile presets.
    if small_vmem:
        tm_pref = tm if tm is not None else 1024
        tn_pref = tn if tn is not None else 1024
    else:
        tm_pref = tm if tm is not None else (2048 if x_isz <= 2 else 1024)
        tn_pref = tn if tn is not None else 1024
    tk_pref = tk if tk is not None else 1024

    # Dtype-dependent sublane alignment for the M tile (8 f32 / 16 bf16 / 32 i8).
    m_align = max(8, 32 // x_isz)

    tm_, Mp = _tile_and_pad(M, tm_pref, m_align)   # sublane alignment
    tn_, Np = _tile_and_pad(nf, tn_pref, 128)      # lane alignment
    tk_, Kp = _tile_and_pad(nx, tk_pref, 128)      # lane (x) / sublane (w)

    # Zero-pad ragged dims; K zero-padding is correctness-critical (padded
    # columns of x / rows of w must contribute nothing to the matmul).
    # TODO(synk): hoist weight/bias padding to parameter-init time for models
    # whose nx/nf are not multiples of 128 (per-call pad re-streams the weight).
    if Mp != M or Kp != nx:
        x2 = jnp.pad(x2, ((0, Mp - M), (0, Kp - nx)))
    w2 = w
    if Kp != nx or Np != nf:
        w2 = jnp.pad(w, ((0, Kp - nx), (0, Np - nf)))
    b2 = b.reshape(1, nf)
    if Np != nf:
        b2 = jnp.pad(b2, ((0, 0), (0, Np - nf)))

    gm = Mp // tm_
    gn = Np // tn_
    gk = Kp // tk_

    # Put the parallel axis with more tiles outermost so 2-TC chips (v7x)
    # stay balanced on skinny-N layers. No effect on 1-TC chips.
    m_outer = gm > gn

    # Scoped VMEM: double-buffered pipelined tiles (+ f32 accumulator only when
    # K is tiled). No extra headroom multiplier on top (already double-counted).
    tile_bytes = 2 * (tm_ * tk_ * x_isz + tk_ * tn_ * w_isz
                      + tn_ * b_isz + tm_ * tn_ * o_isz)
    if gk > 1:
        tile_bytes += tm_ * tn_ * 4
    ceiling = min(int(vmem_cap * 0.8), 100 * 1024 * 1024)
    vmem_limit = int(min(max(tile_bytes + (2 << 20), 32 << 20), ceiling))

    # CostEstimate with the *actual* streamed traffic (operands are re-read
    # once per tile of the other parallel axis).
    cost = pl.CostEstimate(
        flops=2 * M * nx * nf,
        bytes_accessed=int(x2.size * x_isz * gn + w2.size * w_isz * gm
                           + b2.size * b_isz * gm + Mp * Np * o_isz),
        transcendentals=0,
    )

    if gk == 1:
        # -------- fast path: un-tiled K, no accumulator scratch --------
        if m_outer:
            grid = (gm, gn)
            x_map = lambda i, j: (i, 0)
            w_map = lambda i, j: (0, j)
            b_map = lambda i, j: (0, j)
            o_map = lambda i, j: (i, j)
        else:
            grid = (gn, gm)
            x_map = lambda j, i: (i, 0)
            w_map = lambda j, i: (0, j)
            b_map = lambda j, i: (0, j)
            o_map = lambda j, i: (i, j)
        kernel = _conv1d_kernel_k1
        scratch = []
        semantics = ("parallel", "parallel")
    else:
        # -------- tiled K: resident f32 accumulator, K innermost --------
        if m_outer:
            grid = (gm, gn, gk)
            x_map = lambda i, j, k: (i, k)
            w_map = lambda i, j, k: (k, j)
            b_map = lambda i, j, k: (0, j)
            o_map = lambda i, j, k: (i, j)
        else:
            grid = (gn, gm, gk)
            x_map = lambda j, i, k: (i, k)
            w_map = lambda j, i, k: (k, j)
            b_map = lambda j, i, k: (0, j)
            o_map = lambda j, i, k: (i, j)
        kernel = _conv1d_kernel_ktiled
        scratch = [pltpu.VMEM((tm_, tn_), jnp.float32)]
        semantics = ("parallel", "parallel", "arbitrary")

    out = pl.pallas_call(
        kernel,
        out_shape=jax.ShapeDtypeStruct((Mp, Np), out_dtype),
        grid_spec=pltpu.PrefetchScalarGridSpec(
            num_scalar_prefetch=0,
            grid=grid,
            in_specs=[
                pl.BlockSpec((tm_, tk_), x_map),   # x tile
                pl.BlockSpec((tk_, tn_), w_map),   # w tile
                pl.BlockSpec((1, tn_), b_map),     # bias tile
            ],
            out_specs=pl.BlockSpec((tm_, tn_), o_map),
            scratch_shapes=scratch,
        ),
        compiler_params=pltpu.CompilerParams(
            dimension_semantics=semantics,
            vmem_limit_bytes=vmem_limit,
        ),
        cost_estimate=cost,
    )(x2, w2, b2)

    out = out[:M, :nf]
    return out.reshape(*lead, nf)


def init_conv1d_params(key, nx, nf, dtype=jnp.float32):
    # Matches nn.init.normal_(w, std=0.02) and zero bias, deterministically.
    w = 0.02 * jax.random.normal(key, (nx, nf), dtype=dtype)
    b = jnp.zeros((nf,), dtype=dtype)
    return w, b


if __name__ == "__main__":
    key = jax.random.PRNGKey(0)
    kx, kw, kx2, kw2 = jax.random.split(key, 4)

    # Primary small case (batch=2, seq=8, nx=32 -> nf=64): K==1 fast path,
    # single block.
    batch, seq, nx, nf = 2, 8, 32, 64
    x = jax.random.normal(kx, (batch, seq, nx), dtype=jnp.float32)
    w, b = init_conv1d_params(kw, nx, nf)

    y = jax.block_until_ready(conv1d(x, w, b))
    y_ref = (x.reshape(-1, nx) @ w + b).reshape(batch, seq, nf)
    assert y.shape == (batch, seq, nf), y.shape
    assert jnp.allclose(y, y_ref, atol=1e-5, rtol=1e-5), "mismatch (small case)"

    # Secondary case: force M/N/K tiling + ragged zero-padding via explicit
    # small tile overrides (exercises the tiled-K accumulator kernel and the
    # fold-last-partial-into-store path).
    b2_, s2_, nx2, nf2 = 3, 100, 390, 320
    x_big = jax.random.normal(kx2, (b2_, s2_, nx2), dtype=jnp.float32)
    w_big, bias_big = init_conv1d_params(kw2, nx2, nf2)

    y_big = jax.block_until_ready(
        conv1d(x_big, w_big, bias_big, tm=128, tn=256, tk=256))
    y_big_ref = (x_big.reshape(-1, nx2) @ w_big + bias_big).reshape(b2_, s2_, nf2)
    assert y_big.shape == (b2_, s2_, nf2), y_big.shape
    assert jnp.allclose(y_big, y_big_ref, atol=2e-4, rtol=2e-4), \
        "mismatch (tiled case)"

    print("KERNEL_OK")
</pallas_src>

<mosaic_0001>
module attributes {stable_mosaic.version = 11 : i64} {
  func.func @_conv1d_kernel_k1(%arg0: i32, %arg1: i32, %arg2: memref<16x32xf32, #tpu.memory_space<vmem>>, %arg3: memref<32x64xf32, #tpu.memory_space<vmem>>, %arg4: memref<1x64xf32, #tpu.memory_space<vmem>>, %arg5: memref<16x64xf32, #tpu.memory_space<vmem>>) attributes {dimension_semantics = [#tpu.dimension_semantics<parallel>, #tpu.dimension_semantics<parallel>], iteration_bounds = array<i64: 1, 1>, scalar_prefetch = 0 : i64, scratch_operands = 0 : i64, tpu.core_type = #tpu.core_type<tc>, window_params = [{transform_indices = @transform_0, window_bounds = array<i64: 16, 32>}, {transform_indices = @transform_1, window_bounds = array<i64: 32, 64>}, {transform_indices = @transform_2, window_bounds = array<i64: 1, 64>}, {transform_indices = @transform_3, window_bounds = array<i64: 16, 64>}]} {
    %c0 = arith.constant 0 : index
    %c0_0 = arith.constant 0 : index
    %0 = vector.load %arg2[%c0, %c0_0] : memref<16x32xf32, #tpu.memory_space<vmem>>, vector<16x32xf32>
    %c0_1 = arith.constant 0 : index
    %c0_2 = arith.constant 0 : index
    %1 = vector.load %arg3[%c0_1, %c0_2] : memref<32x64xf32, #tpu.memory_space<vmem>>, vector<32x64xf32>
    %cst = arith.constant dense<0.000000e+00> : vector<16x64xf32>
    %2 = tpu.matmul %0, %1, %cst {dimension_numbers = #tpu.dot_dimension_numbers<[1], [0], [0], [1], [0, 0, 1, 1], [], []>} : vector<16x32xf32>, vector<32x64xf32>, vector<16x64xf32> -> vector<16x64xf32>
    %c0_3 = arith.constant 0 : index
    %c0_4 = arith.constant 0 : index
    %3 = vector.load %arg4[%c0_3, %c0_4] : memref<1x64xf32, #tpu.memory_space<vmem>>, vector<1x64xf32>
    %4 = vector.broadcast %3 : vector<1x64xf32> to vector<16x64xf32>
    %5 = arith.addf %2, %4 : vector<16x64xf32>
    %c0_5 = arith.constant 0 : index
    %c0_6 = arith.constant 0 : index
    %6 = vector.load %arg5[%c0_5, %c0_6] : memref<16x64xf32, #tpu.memory_space<vmem>>, vector<16x64xf32>
    tpu.vector_store %arg5[%c0_5, %c0_6], %5 {strides = array<i32>} : memref<16x64xf32, #tpu.memory_space<vmem>>, vector<16x64xf32>,
    return
  }
  func.func @transform_0(%arg0: i32, %arg1: i32) -> (i32, i32) {
    %c0_i32 = arith.constant 0 : i32
    %c0_i32_0 = arith.constant 0 : i32
    return %arg1, %c0_i32 : i32, i32
  }
  func.func @transform_1(%arg0: i32, %arg1: i32) -> (i32, i32) {
    %c0_i32 = arith.constant 0 : i32
    %c0_i32_0 = arith.constant 0 : i32
    return %c0_i32, %arg0 : i32, i32
  }
  func.func @transform_2(%arg0: i32, %arg1: i32) -> (i32, i32) {
    %c0_i32 = arith.constant 0 : i32
    %c0_i32_0 = arith.constant 0 : i32
    return %c0_i32, %arg0 : i32, i32
  }
  func.func @transform_3(%arg0: i32, %arg1: i32) -> (i32, i32) {
    %c0_i32 = arith.constant 0 : i32
    return %arg1, %arg0 : i32, i32
  }
}

</mosaic_0001>

<llo_original>
// kernel: tpu_custom_call.1
$region0: #{tpu_custom_call.1}
  #allocation0 [shape = 'u32[]', space=smem, size = 0x4, offset = 0x4, fixed_abs, tag = 'smem constant byte address 0x4 - core index']
  #allocation1 [shape = 'u32[144,128]{1,0:T(1,128)}', space=vmem, size = 0x12000, scoped, tag = 'internal scratch']
  %s0 = inlined_call_operand.hbm [shape: f32[16,32], index: 0, kind: input, shape index: {}]
  %s1 = inlined_call_operand.hbm [shape: f32[32,64], index: 1, kind: input, shape index: {}]
  %s2 = inlined_call_operand.vmem [shape: f32[1,64], index: 2, kind: input, shape index: {}]
  %s3 = inlined_call_operand.hbm [shape: f32[16,64], index: 3, kind: output, shape index: {}]
  %s4 = sld [smem:[#allocation0]]
  $region30: #{tpu_custom_call.1} parent=0
    _
  %s6 = ssub.s32 1, %s4
  %s7 = scalar_select 0, %s6, %s4
  $region1: #{tpu_custom_call.1} parent=0
    #allocation2 [shape = 'u8[8192]{0}', space=vmem, size = 0x2000, scoped, tag = 'input window, operand 0, single buffered']
    #allocation3 [shape = 's32[1]{0}', space=sflag, size = 0x4, scoped, tag = 'scoped memory for tpu_custom_call.1']
    #allocation4 [shape = 's32[1]{0}', space=sflag, size = 0x4, scoped, tag = 'scoped memory for tpu_custom_call.1']
    #allocation5 [shape = 'u8[16384]{0}', space=vmem, size = 0x4000, scoped, tag = 'input window, operand 1, single buffered']
    #allocation6 [shape = 's32[1]{0}', space=sflag, size = 0x4, scoped, tag = 'scoped memory for tpu_custom_call.1']
    #allocation7 [shape = 'u8[8192]{0}', space=vmem, size = 0x2000, scoped, tag = 'output window, operand 0, single buffered']
    %8 = vsyncpa [#allocation3], 0
    %9 = vsyncpa [#allocation6], 0
    %10 = vsyncpa [#allocation4], 0
    // Predicated region
    $region2: #{tpu_custom_call.1} parent=1 // pred_check
      _
    $region3: #{tpu_custom_call.1} parent=1 // pred_check_branch
      %12 = sbr.rel (0) target = $region5
    $region4: #{tpu_custom_call.1} parent=1 // pred_region
      %s14 = ssub.s32 256, 256
      %15 = vsyncadd [#allocation3], %s14
      %s16 = sshll.u32 [#allocation2], 4
      %s17 = int_to_ptr.vmem [resolvable:$true] %s16
      %22 = dma.hbm_to_vmem [thread:$0]  %s0, 256, %s17, [#allocation3], 128, 128, 8
    $region5: #{tpu_custom_call.1} parent=1 // pred_fallthru
      _
    // Predicated region
    $region6: #{tpu_custom_call.1} parent=1 // pred_check
      _
    $region7: #{tpu_custom_call.1} parent=1 // pred_check_branch
      %24 = sbr.rel (0) target = $region9
    $region8: #{tpu_custom_call.1} parent=1 // pred_region
      %s26 = ssub.s32 512, 512
      %27 = vsyncadd [#allocation6], %s26
      %s28 = sshll.u32 [#allocation5], 4
      %s29 = int_to_ptr.vmem [resolvable:$true] %s28
      %34 = dma.hbm_to_vmem [thread:$0]  %s1, 512, %s29, [#allocation6], 128, 128, 8
    $region9: #{tpu_custom_call.1} parent=1 // pred_fallthru
      _
    // Predicated region
    $region10: #{tpu_custom_call.1} parent=1 // pred_check
      _
    $region11: #{tpu_custom_call.1} parent=1 // pred_check_branch
      %36 = sbr.rel (0) target = $region13
    $region12: #{tpu_custom_call.1} parent=1 // pred_region
      _
    $region13: #{tpu_custom_call.1} parent=1 // pred_fallthru
      _
    // Predicated region
    $region14: #{tpu_custom_call.1} parent=1 // pred_check
      _
    $region15: #{tpu_custom_call.1} parent=1 // pred_check_branch
      %38 = sbr.rel (0) target = $region17
    $region16: #{tpu_custom_call.1} parent=1 // pred_region
      %39 = dma.done [#allocation3], 256
    $region17: #{tpu_custom_call.1} parent=1 // pred_fallthru
      _
    // Predicated region
    $region18: #{tpu_custom_call.1} parent=1 // pred_check
      _
    $region19: #{tpu_custom_call.1} parent=1 // pred_check_branch
      %41 = sbr.rel (0) target = $region21
    $region20: #{tpu_custom_call.1} parent=1 // pred_region
      %42 = dma.done [#allocation6], 512
    $region21: #{tpu_custom_call.1} parent=1 // pred_fallthru
      _
    %v43 = vld [vmem:[#allocation2] sm:$0xff]
    %v44 = vld [vmem:[#allocation2 + $0x8] sm:$0xff]
    %v45 = vld [vmem:[#allocation5] sm:$0xff]
    %v46 = vld [vmem:[#allocation5 + $0x8] sm:$0xff]
    %v47 = vld [vmem:[#allocation5 + $0x10] sm:$0xff]
    %v48 = vld [vmem:[#allocation5 + $0x18] sm:$0xff]
    %v49 = vld [vmem:[%s2] sm:$0x1]
    %v51 = vlaneseq
    %v52 = vshrl.u32 %v51, 7
    %v53 = vsub.s32 0, %v52
    %v54 = vrot.slane %v49, %v53
    %vm56 = vcmask 261120
    %v58 = vsel %vm56, %v43, 0
    %v61 = vsel %vm56, %v44, 0
    %63 = vmatprep.subr.mxu0 0.0
    %64 = vmatpush1.msra.mxu0 %v45
    %65 = vmatprep.subr.mxu0 0.0
    %66 = vmatpush1.msra.mxu0 %v46
    %67 = vmatprep.subr.mxu0 0.0
    %68 = vmatpush1.msra.mxu0 %v47
    %69 = vmatprep.subr.mxu0 0.0
    %70 = vmatpush1.msra.mxu0 %v48
    %71 = vmatprep.subr.mxu0 0.0
    %72 = vmatpush1.msra.mxu0 0.0
    %73 = vmatprep.subr.mxu0 0.0
    %74 = vmatpush1.msra.mxu0 0.0
    %75 = vmatprep.subr.mxu0 0.0
    %76 = vmatpush1.msra.mxu0 0.0
    %77 = vmatprep.subr.mxu0 0.0
    %78 = vmatpush1.msra.mxu0 0.0
    %79 = vmatprep.subr.mxu0 0.0
    %80 = vmatpush1.msra.mxu0 0.0
    %81 = vmatprep.subr.mxu0 0.0
    %82 = vmatpush1.msra.mxu0 0.0
    %83 = vmatprep.subr.mxu0 0.0
    %84 = vmatpush1.msra.mxu0 0.0
    %85 = vmatprep.subr.mxu0 0.0
    %86 = vmatpush1.msra.mxu0 0.0
    %87 = vmatprep.subr.mxu0 0.0
    %88 = vmatpush1.msra.mxu0 0.0
    %89 = vmatprep.subr.mxu0 0.0
    %90 = vmatpush1.msra.mxu0 0.0
    %91 = vmatprep.subr.mxu0 0.0
    %92 = vmatpush1.msra.mxu0 0.0
    %93 = vmatprep.subr.mxu0 0.0
    %94 = vmatpush1.msra.mxu0 0.0
    %95 = vmatprep.subr.mxu0 0.0
    %96 = vmatpush1.msra.mxu0 0.0
    %97 = vmatprep.subr.mxu0 0.0
    %98 = vmatpush1.msra.mxu0 0.0
    %99 = vmatprep.subr.mxu0 0.0
    %100 = vmatpush1.msra.mxu0 0.0
    %101 = vmatprep.subr.mxu0 0.0
    %102 = vmatpush1.msra.mxu0 0.0
    %103 = vmatprep.subr.mxu0 0.0
    %104 = vmatpush1.msra.mxu0 0.0
    %105 = vmatprep.subr.mxu0 0.0
    %106 = vmatpush1.msra.mxu0 0.0
    %107 = vmatprep.subr.mxu0 0.0
    %108 = vmatpush1.msra.mxu0 0.0
    %109 = vmatprep.subr.mxu0 0.0
    %110 = vmatpush1.msra.mxu0 0.0
    %111 = vmatprep.subr.mxu0 0.0
    %112 = vmatpush1.msra.mxu0 0.0
    %113 = vmatprep.subr.mxu0 0.0
    %114 = vmatpush1.msra.mxu0 0.0
    %115 = vmatprep.subr.mxu0 0.0
    %116 = vmatpush1.msra.mxu0 0.0
    %117 = vmatprep.subr.mxu0 0.0
    %118 = vmatpush1.msra.mxu0 0.0
    %119 = vmatprep.subr.mxu0 0.0
    %120 = vmatpush1.msra.mxu0 0.0
    %121 = vmatprep.subr.mxu0 0.0
    %122 = vmatpush1.msra.mxu0 0.0
    %123 = vmatprep.subr.mxu0 0.0
    %124 = vmatpush1.msra.mxu0 0.0
    %125 = vmatprep.subr.mxu0 0.0
    %126 = vmatpush1.msra.mxu0 0.0
    %127 = vmatprep.mubr.f32.mxu0 0.0
    %128 = vmatmul.mubr.f32.gmra.mrb[0].mxu0 %v58
    %v129 = vpop.f32.mrb[0].mxu0
    %v130 = vadd.f32 %v54, %v129
    %v131 = vpop.f32.mrb[0].mxu0
    %132 = vmatprep.mubr.f32.mxu0 0.0
    %133 = vmatmul.mubr.f32.gmra.mrb[0].mxu0 %v61
    %v134 = vpop.f32.mrb[0].mxu0
    %v135 = vadd.f32 %v54, %v134
    %v136 = vpop.f32.mrb[0].mxu0
    %137 = vdwg.mxu0
    %vm138 = vcmask 523264
    %139 = vst.msk [vmem:[#allocation7] sm:$0xff] %vm138, %v130
    %140 = vst.msk [vmem:[#allocation7 + $0x8] sm:$0xff] %vm138, %v135
    // Predicated region
    $region22: #{tpu_custom_call.1} parent=1 // pred_check
      _
    $region23: #{tpu_custom_call.1} parent=1 // pred_check_branch
      %142 = sbr.rel (0) target = $region25
    $region24: #{tpu_custom_call.1} parent=1 // pred_region
      %s144 = ssub.s32 256, 256
      %145 = vsyncadd [#allocation4], %s144
      %s146 = sshll.u32 [#allocation7], 4
      %s147 = int_to_ptr.vmem [resolvable:$true] %s146
      %152 = dma.vmem_to_hbm [thread:$0]  %s147, 256, %s3, [#allocation4], 128, 128, 8
    $region25: #{tpu_custom_call.1} parent=1 // pred_fallthru
      _
    // Predicated region
    $region26: #{tpu_custom_call.1} parent=1 // pred_check
      _
    $region27: #{tpu_custom_call.1} parent=1 // pred_check_branch
      %154 = sbr.rel (0) target = $region29
    $region28: #{tpu_custom_call.1} parent=1 // pred_region
      %155 = dma.done [#allocation4], 256
    $region29: #{tpu_custom_call.1} parent=1 // pred_fallthru
      _
    %156 = vsyncpa [#allocation3], 1
    %157 = vsyncpa [#allocation6], 1
    %158 = vsyncpa [#allocation4], 1

</llo_original>
